<compile_context>
chip_gen: v7x
topology: tpu7x:2x2x1
jax: 0.10.0
libtpu: 0.0.40
codegen_flags: <defaults>
</compile_context>

<pallas_src>
import functools
import math

import jax
import jax.numpy as jnp
from jax.experimental import pallas as pl
from jax.experimental.pallas import tpu as pltpu


def _round_up(x, m):
    return ((x + m - 1) // m) * m


def _default_vmem_limit_bytes():
    """~75% of physical VMEM: 96 MiB on v5e/v6e (128 MiB), 48 MiB on v7x (64 MiB)."""
    cap = 128 * 1024 * 1024
    try:
        cap = int(getattr(pltpu.get_tpu_info(), "vmem_capacity_bytes", cap))
    except Exception:
        pass
    return (cap * 3) // 4


def _pick_tile_m(M, requested):
    """Multiple-of-8 row tile <= requested.  Prefers a tile that divides M
    exactly (no padding copies) and yields >= 2 row tiles when M >= 16 so the
    'parallel' grid axis can shard across v7x's two TensorCores."""
    cap = requested
    if M >= 16:
        cap = min(cap, _round_up((M + 1) // 2, 8))   # at least 2 row tiles
    cap = max(8, min(cap, _round_up(M, 8)))
    cap = (cap // 8) * 8
    for t in range(cap, 7, -8):
        if M % t == 0:
            return t
    return cap  # no multiple-of-8 divisor of M: caller pads the ragged tail


def _mlp_kernel(tile_h, resident, x_ref, wfc_ref, bfc_ref, wproj_ref,
                bproj_ref, o_ref, acc_ref):
    """acc = b_proj + sum_h gelu(x @ Wfc[:, h] + bfc[h]) @ Wproj[h, :]."""
    h = pl.program_id(1)

    @pl.when(h == 0)
    def _():
        # Seed the accumulator with the projection bias (saves an epilogue add).
        acc_ref[...] = jnp.broadcast_to(
            bproj_ref[...].astype(jnp.float32), acc_ref.shape)

    if resident:
        # Weights are VMEM-resident full arrays; slice the current hidden chunk.
        off = pl.multiple_of(h * tile_h, 128)
        wfc = wfc_ref[:, pl.ds(off, tile_h)]
        bfc = bfc_ref[:, pl.ds(off, tile_h)]
        wproj = wproj_ref[pl.ds(off, tile_h), :]
    else:
        # Streamed path: BlockSpec already delivered this hidden tile.
        wfc = wfc_ref[...]
        bfc = bfc_ref[...]
        wproj = wproj_ref[...]

    # c_fc for this hidden chunk: (tm, C) @ (C, th) + (1, th), f32 accumulate.
    a = jnp.dot(x_ref[...], wfc, preferred_element_type=jnp.float32)
    a = a + bfc.astype(jnp.float32)

    # GELU, tanh approximation (matches nn.GELU(approximate='tanh')), in f32.
    # Rewritten as c*a*(1 + 0.044715*a^2) to drop a multiply per element.
    c0 = 0.7978845608028654  # sqrt(2/pi)
    a2 = a * a
    g = 0.5 * a * (1.0 + jnp.tanh(c0 * a * (1.0 + 0.044715 * a2)))

    # c_proj partial: (tm, th) @ (th, C), accumulated over hidden chunks.
    acc_ref[...] += jnp.dot(g.astype(wproj.dtype), wproj,
                            preferred_element_type=jnp.float32)

    @pl.when(h == pl.num_programs(1) - 1)
    def _():
        o_ref[...] = acc_ref[...].astype(o_ref.dtype)


def mlp_pallas(x, w_fc, b_fc, w_proj, b_proj, *, operand_dtype=jnp.bfloat16,
               tile_m=512, tile_h=512, weights_resident=None,
               vmem_limit_bytes=None):
    """x: (B, T, C). w_fc: (C, 4C), b_fc: (4C,), w_proj: (4C, C), b_proj: (C,).

    operand_dtype: dtype used for x / W_fc / W_proj on the MXU (bf16 default).
    Accumulation, bias adds and GELU are always f32; output keeps x.dtype.
    """
    B, T, C = x.shape
    Cin, H = w_fc.shape
    assert Cin == C and w_proj.shape == (H, C) and b_fc.shape == (H,)
    assert C % 128 == 0, "n_embd must be a multiple of 128 (lane width)"

    out_dtype = x.dtype
    M = B * T

    if vmem_limit_bytes is None:
        vmem_limit_bytes = _default_vmem_limit_bytes()

    tile_h = min(tile_h, H)
    if H % tile_h != 0 or tile_h % 128 != 0:
        tile_h = 128
    assert H % tile_h == 0 and tile_h % 128 == 0

    tile_m = _pick_tile_m(M, tile_m)
    M_pad = _round_up(M, tile_m)

    op_bytes = jnp.dtype(operand_dtype).itemsize
    out_bytes = jnp.dtype(out_dtype).itemsize
    if weights_resident is None:
        # Budget check (conservatively assume the resident weight blocks may be
        # double-buffered).  If it doesn't fit (e.g. GPT-2-XL on v7x), stream.
        resident_bytes = 2 * (2 * C * H * op_bytes)
        act_bytes = (2 * tile_m * C * op_bytes      # x tiles (depth-2 pipeline)
                     + tile_m * C * 4               # f32 accumulator scratch
                     + 2 * tile_m * C * out_bytes)  # out tiles (depth-2)
        weights_resident = (resident_bytes + act_bytes) <= int(0.8 * vmem_limit_bytes)

    # Cast operands (bf16 by default: MXU-native + half the weight DMA bytes);
    # biases stay f32, accumulation / GELU stay f32 inside the kernel.
    x2 = x.reshape(M, C).astype(operand_dtype)
    w_fc_c = w_fc.astype(operand_dtype)
    w_proj_c = w_proj.astype(operand_dtype)
    b_fc2 = b_fc.reshape(1, H).astype(jnp.float32)
    b_proj2 = b_proj.reshape(1, C).astype(jnp.float32)

    if M_pad != M:  # only for ragged M (no multiple-of-8 divisor)
        x2 = jnp.pad(x2, ((0, M_pad - M), (0, 0)))

    grid = (M_pad // tile_m, H // tile_h)

    if weights_resident:
        # Constant index_map -> weights DMA'd into VMEM once for the whole call.
        wfc_spec = pl.BlockSpec((C, H), lambda i, h: (0, 0))
        bfc_spec = pl.BlockSpec((1, H), lambda i, h: (0, 0))
        wproj_spec = pl.BlockSpec((H, C), lambda i, h: (0, 0))
    else:
        # Streamed per-hidden-tile weight blocks (large tile_m amortizes them).
        wfc_spec = pl.BlockSpec((C, tile_h), lambda i, h: (0, h))
        bfc_spec = pl.BlockSpec((1, tile_h), lambda i, h: (0, h))
        wproj_spec = pl.BlockSpec((tile_h, C), lambda i, h: (h, 0))

    kernel = functools.partial(_mlp_kernel, tile_h, weights_resident)

    out2 = pl.pallas_call(
        kernel,
        out_shape=jax.ShapeDtypeStruct((M_pad, C), out_dtype),
        grid_spec=pltpu.PrefetchScalarGridSpec(
            num_scalar_prefetch=0,
            grid=grid,
            in_specs=[
                pl.BlockSpec((tile_m, C), lambda i, h: (i, 0)),   # x row tile
                wfc_spec,                                         # W_fc
                bfc_spec,                                         # b_fc
                wproj_spec,                                       # W_proj
                pl.BlockSpec((1, C), lambda i, h: (0, 0)),        # b_proj
            ],
            out_specs=pl.BlockSpec((tile_m, C), lambda i, h: (i, 0)),
            scratch_shapes=[pltpu.VMEM((tile_m, C), jnp.float32)],
        ),
        compiler_params=pltpu.CompilerParams(
            # rows are independent (megacore-shardable); hidden is a reduction
            dimension_semantics=("parallel", "arbitrary"),
            vmem_limit_bytes=int(vmem_limit_bytes),
        ),
    )(x2, w_fc_c, b_fc2, w_proj_c, b_proj2)

    if M_pad != M:
        out2 = out2[:M]
    return out2.reshape(B, T, C)


def mlp_reference(x, w_fc, b_fc, w_proj, b_proj):
    a = jnp.einsum("btc,ch->bth", x, w_fc) + b_fc
    c = math.sqrt(2.0 / math.pi)
    g = 0.5 * a * (1.0 + jnp.tanh(c * (a + 0.044715 * a ** 3)))
    return jnp.einsum("bth,hc->btc", g, w_proj) + b_proj


if __name__ == "__main__":
    # Small GPT-ish shapes: batch=2, seq=8, n_embd=128 -> hidden=512
    B, T, C = 2, 8, 128
    H = 4 * C

    key = jax.random.PRNGKey(0)
    kx, k1, k2, k3, k4 = jax.random.split(key, 5)

    x = jax.random.normal(kx, (B, T, C), dtype=jnp.float32)

    # nn.Linear(C, 4C): weight (4C, C), bias (4C,) -- init deterministically,
    # then store transposed (in, out) for the kernel.
    w_fc_pt = jax.random.normal(k1, (H, C), dtype=jnp.float32) * (1.0 / math.sqrt(C))
    b_fc = jax.random.normal(k2, (H,), dtype=jnp.float32) * 0.01
    # nn.Linear(4C, C): weight (C, 4C), bias (C,)
    w_proj_pt = jax.random.normal(k3, (C, H), dtype=jnp.float32) * (1.0 / math.sqrt(H))
    b_proj = jax.random.normal(k4, (C,), dtype=jnp.float32) * 0.01

    w_fc = w_fc_pt.T      # (C, H)
    w_proj = w_proj_pt.T  # (H, C)

    # 1) Exact-precision check (f32 operands) against the f32 reference.
    out_f32 = jax.block_until_ready(
        mlp_pallas(x, w_fc, b_fc, w_proj, b_proj, operand_dtype=jnp.float32))
    ref_f32 = mlp_reference(x, w_fc, b_fc, w_proj, b_proj)
    assert out_f32.shape == (B, T, C)
    assert jnp.allclose(out_f32, ref_f32, atol=1e-4, rtol=1e-4), "f32 mismatch"

    # 2) Default production path: bf16 operands, f32 accumulate / GELU.
    #    Compared against the reference evaluated on bf16-rounded operands
    #    (the remaining delta is the bf16 cast of g before c_proj).
    out_bf16 = jax.block_until_ready(mlp_pallas(x, w_fc, b_fc, w_proj, b_proj))
    ref_bf16 = mlp_reference(
        x.astype(jnp.bfloat16).astype(jnp.float32),
        w_fc.astype(jnp.bfloat16).astype(jnp.float32), b_fc,
        w_proj.astype(jnp.bfloat16).astype(jnp.float32), b_proj)
    assert out_bf16.shape == (B, T, C)
    assert jnp.allclose(out_bf16, ref_bf16, atol=2e-2, rtol=2e-2), "bf16 mismatch"

    print("KERNEL_OK")
</pallas_src>

<mosaic_0001>
module attributes {stable_mosaic.version = 11 : i64} {
  func.func @_mlp_kernel(%arg0: i32, %arg1: i32, %arg2: memref<8x128xf32, #tpu.memory_space<vmem>>, %arg3: memref<128x512xf32, #tpu.memory_space<vmem>>, %arg4: memref<1x512xf32, #tpu.memory_space<vmem>>, %arg5: memref<512x128xf32, #tpu.memory_space<vmem>>, %arg6: memref<1x128xf32, #tpu.memory_space<vmem>>, %arg7: memref<8x128xf32, #tpu.memory_space<vmem>>, %arg8: memref<8x128xf32, #tpu.memory_space<vmem>>) attributes {dimension_semantics = [#tpu.dimension_semantics<parallel>, #tpu.dimension_semantics<arbitrary>], iteration_bounds = array<i64: 2, 1>, scalar_prefetch = 0 : i64, scratch_operands = 1 : i64, tpu.core_type = #tpu.core_type<tc>, window_params = [{transform_indices = @transform_0, window_bounds = array<i64: 8, 128>}, {pipeline_mode = #tpu.pipeline_mode<synchronous>, transform_indices = @transform_1, window_bounds = array<i64: 128, 512>}, {pipeline_mode = #tpu.pipeline_mode<synchronous>, transform_indices = @transform_2, window_bounds = array<i64: 1, 512>}, {pipeline_mode = #tpu.pipeline_mode<synchronous>, transform_indices = @transform_3, window_bounds = array<i64: 512, 128>}, {pipeline_mode = #tpu.pipeline_mode<synchronous>, transform_indices = @transform_4, window_bounds = array<i64: 1, 128>}, {transform_indices = @transform_5, window_bounds = array<i64: 8, 128>}]} {
    %c0_i32 = arith.constant 0 : i32
    %0 = arith.cmpi eq, %arg1, %c0_i32 : i32
    %1 = arith.extui %0 : i1 to i32
    %c0_i32_0 = arith.constant 0 : i32
    %2 = arith.cmpi ne, %1, %c0_i32_0 : i32
    scf.if %2 {
      %c0_17 = arith.constant 0 : index
      %c0_18 = arith.constant 0 : index
      %36 = vector.load %arg6[%c0_17, %c0_18] : memref<1x128xf32, #tpu.memory_space<vmem>>, vector<1x128xf32>
      %37 = vector.shape_cast %36 : vector<1x128xf32> to vector<1x128xf32>
      %38 = vector.broadcast %37 : vector<1x128xf32> to vector<8x128xf32>
      %c0_19 = arith.constant 0 : index
      %c0_20 = arith.constant 0 : index
      %39 = vector.load %arg8[%c0_19, %c0_20] : memref<8x128xf32, #tpu.memory_space<vmem>>, vector<8x128xf32>
      tpu.vector_store %arg8[%c0_19, %c0_20], %38 {strides = array<i32>} : memref<8x128xf32, #tpu.memory_space<vmem>>, vector<8x128xf32>,
    } else {
    }
    %c512_i32 = arith.constant 512 : i32
    %3 = arith.muli %arg1, %c512_i32 : i32
    %4 = tpu.assume_multiple %3, 128 : i32
    %c0 = arith.constant 0 : index
    %5 = arith.index_cast %4 : i32 to index
    %6 = vector.load %arg3[%c0, %5] : memref<128x512xf32, #tpu.memory_space<vmem>>, vector<128x512xf32>
    %c0_1 = arith.constant 0 : index
    %7 = arith.index_cast %4 : i32 to index
    %8 = vector.load %arg4[%c0_1, %7] : memref<1x512xf32, #tpu.memory_space<vmem>>, vector<1x512xf32>
    %9 = arith.index_cast %4 : i32 to index
    %c0_2 = arith.constant 0 : index
    %10 = vector.load %arg5[%9, %c0_2] : memref<512x128xf32, #tpu.memory_space<vmem>>, vector<512x128xf32>
    %c0_3 = arith.constant 0 : index
    %c0_4 = arith.constant 0 : index
    %11 = vector.load %arg2[%c0_3, %c0_4] : memref<8x128xf32, #tpu.memory_space<vmem>>, vector<8x128xf32>
    %cst = arith.constant dense<0.000000e+00> : vector<8x512xf32>
    %12 = tpu.matmul %11, %6, %cst {dimension_numbers = #tpu.dot_dimension_numbers<[1], [0], [0], [1], [0, 0, 1, 1], [], []>} : vector<8x128xf32>, vector<128x512xf32>, vector<8x512xf32> -> vector<8x512xf32>
    %13 = vector.broadcast %8 : vector<1x512xf32> to vector<8x512xf32>
    %14 = arith.addf %12, %13 : vector<8x512xf32>
    %15 = arith.mulf %14, %14 : vector<8x512xf32>
    %cst_5 = arith.constant 5.000000e-01 : f32
    %16 = vector.broadcast %cst_5 : f32 to vector<8x512xf32>
    %17 = arith.mulf %16, %14 : vector<8x512xf32>
    %cst_6 = arith.constant 0.797884583 : f32
    %18 = vector.broadcast %cst_6 : f32 to vector<8x512xf32>
    %19 = arith.mulf %18, %14 : vector<8x512xf32>
    %cst_7 = arith.constant 4.471500e-02 : f32
    %20 = vector.broadcast %cst_7 : f32 to vector<8x512xf32>
    %21 = arith.mulf %20, %15 : vector<8x512xf32>
    %cst_8 = arith.constant 1.000000e+00 : f32
    %22 = vector.broadcast %cst_8 : f32 to vector<8x512xf32>
    %23 = arith.addf %22, %21 : vector<8x512xf32>
    %24 = arith.mulf %19, %23 : vector<8x512xf32>
    %25 = math.tanh %24 : vector<8x512xf32>
    %cst_9 = arith.constant 1.000000e+00 : f32
    %26 = vector.broadcast %cst_9 : f32 to vector<8x512xf32>
    %27 = arith.addf %26, %25 : vector<8x512xf32>
    %28 = arith.mulf %17, %27 : vector<8x512xf32>
    %c0_10 = arith.constant 0 : index
    %c0_11 = arith.constant 0 : index
    %29 = vector.load %arg8[%c0_10, %c0_11] : memref<8x128xf32, #tpu.memory_space<vmem>>, vector<8x128xf32>
    %cst_12 = arith.constant dense<0.000000e+00> : vector<8x128xf32>
    %30 = tpu.matmul %28, %10, %cst_12 {dimension_numbers = #tpu.dot_dimension_numbers<[1], [0], [0], [1], [0, 0, 1, 1], [], []>} : vector<8x512xf32>, vector<512x128xf32>, vector<8x128xf32> -> vector<8x128xf32>
    %31 = arith.addf %29, %30 : vector<8x128xf32>
    %c0_13 = arith.constant 0 : index
    %c0_14 = arith.constant 0 : index
    %32 = vector.load %arg8[%c0_13, %c0_14] : memref<8x128xf32, #tpu.memory_space<vmem>>, vector<8x128xf32>
    tpu.vector_store %arg8[%c0_13, %c0_14], %31 {strides = array<i32>} : memref<8x128xf32, #tpu.memory_space<vmem>>, vector<8x128xf32>,
    %c0_i32_15 = arith.constant 0 : i32
    %33 = arith.cmpi eq, %arg1, %c0_i32_15 : i32
    %34 = arith.extui %33 : i1 to i32
    %c0_i32_16 = arith.constant 0 : i32
    %35 = arith.cmpi ne, %34, %c0_i32_16 : i32
    scf.if %35 {
      %c0_17 = arith.constant 0 : index
      %c0_18 = arith.constant 0 : index
      %36 = vector.load %arg8[%c0_17, %c0_18] : memref<8x128xf32, #tpu.memory_space<vmem>>, vector<8x128xf32>
      %c0_19 = arith.constant 0 : index
      %c0_20 = arith.constant 0 : index
      %37 = vector.load %arg7[%c0_19, %c0_20] : memref<8x128xf32, #tpu.memory_space<vmem>>, vector<8x128xf32>
      tpu.vector_store %arg7[%c0_19, %c0_20], %36 {strides = array<i32>} : memref<8x128xf32, #tpu.memory_space<vmem>>, vector<8x128xf32>,
    } else {
    }
    return
  }
  func.func @transform_0(%arg0: i32, %arg1: i32) -> (i32, i32) {
    %c0_i32 = arith.constant 0 : i32
    %c0_i32_0 = arith.constant 0 : i32
    return %arg0, %c0_i32 : i32, i32
  }
  func.func @transform_1(%arg0: i32, %arg1: i32) -> (i32, i32) {
    %c0_i32 = arith.constant 0 : i32
    %c0_i32_0 = arith.constant 0 : i32
    %c0_i32_1 = arith.constant 0 : i32
    return %c0_i32, %c0_i32_0 : i32, i32
  }
  func.func @transform_2(%arg0: i32, %arg1: i32) -> (i32, i32) {
    %c0_i32 = arith.constant 0 : i32
    %c0_i32_0 = arith.constant 0 : i32
    %c0_i32_1 = arith.constant 0 : i32
    return %c0_i32, %c0_i32_0 : i32, i32
  }
  func.func @transform_3(%arg0: i32, %arg1: i32) -> (i32, i32) {
    %c0_i32 = arith.constant 0 : i32
    %c0_i32_0 = arith.constant 0 : i32
    %c0_i32_1 = arith.constant 0 : i32
    return %c0_i32, %c0_i32_0 : i32, i32
  }
  func.func @transform_4(%arg0: i32, %arg1: i32) -> (i32, i32) {
    %c0_i32 = arith.constant 0 : i32
    %c0_i32_0 = arith.constant 0 : i32
    %c0_i32_1 = arith.constant 0 : i32
    return %c0_i32, %c0_i32_0 : i32, i32
  }
  func.func @transform_5(%arg0: i32, %arg1: i32) -> (i32, i32) {
    %c0_i32 = arith.constant 0 : i32
    %c0_i32_0 = arith.constant 0 : i32
    return %arg0, %c0_i32 : i32, i32
  }
}

</mosaic_0001>

<llo_original>
// kernel: tpu_custom_call.1
$region0: #{tpu_custom_call.1}
  #allocation0 [shape = 'u32[]', space=smem, size = 0x4, offset = 0x4, fixed_abs, tag = 'smem constant byte address 0x4 - core index']
  #allocation1 [shape = 'u32[144,128]{1,0:T(1,128)}', space=vmem, size = 0x12000, scoped, tag = 'internal scratch']
  #allocation2 [shape = 'f32[8,128]{1,0:T(8,128)}', space=vmem, size = 0x1000, scoped, tag = 'scratch operand']
  %s0 = inlined_call_operand.hbm [shape: f32[16,128], index: 0, kind: input, shape index: {}]
  %s1 = inlined_call_operand.hbm [shape: f32[128,512], index: 1, kind: input, shape index: {}]
  %s2 = inlined_call_operand.hbm [shape: f32[1,512], index: 2, kind: input, shape index: {}]
  %s3 = inlined_call_operand.hbm [shape: f32[512,128], index: 3, kind: input, shape index: {}]
  %s4 = inlined_call_operand.hbm [shape: f32[1,128], index: 4, kind: input, shape index: {}]
  %s5 = inlined_call_operand.hbm [shape: f32[16,128], index: 5, kind: output, shape index: {}]
  %s6 = sld [smem:[#allocation0]]
  $region81: #{tpu_custom_call.1} parent=0
    _
  %s8 = ssub.s32 1, %s6
  %s9 = scalar_select 0, %s8, %s6
  $region1: #{tpu_custom_call.1} parent=0
    #allocation3 [shape = 'u8[8192]{0}', space=vmem, size = 0x2000, scoped, tag = 'input window, operand 0']
    #allocation4 [shape = 's32[2]{0}', space=sflag, size = 0x8, scoped, tag = 'scoped memory for tpu_custom_call.1']
    #allocation5 [shape = 's32[2]{0}', space=sflag, size = 0x8, scoped, tag = 'scoped memory for tpu_custom_call.1']
    #allocation6 [shape = 'u8[262144]{0}', space=vmem, size = 0x40000, scoped, tag = 'input window, operand 1, single buffered']
    #allocation7 [shape = 's32[1]{0}', space=sflag, size = 0x4, scoped, tag = 'scoped memory for tpu_custom_call.1']
    #allocation8 [shape = 'u8[2048]{0}', space=vmem, size = 0x800, scoped, tag = 'input window, operand 2, single buffered']
    #allocation9 [shape = 'u8[262144]{0}', space=vmem, size = 0x40000, scoped, tag = 'input window, operand 3, single buffered']
    #allocation10 [shape = 's32[1]{0}', space=sflag, size = 0x4, scoped, tag = 'scoped memory for tpu_custom_call.1']
    #allocation11 [shape = 'u8[512]{0}', space=vmem, size = 0x400, scoped, tag = 'input window, operand 4, single buffered']
    #allocation12 [shape = 'u8[8192]{0}', space=vmem, size = 0x2000, scoped, tag = 'output window, operand 0']
    %10 = vsyncpa [#allocation4], 0
    %s11 = scalar_lea.sflag [#allocation4], 1
    %12 = vsyncpa %s11, 0
    %13 = vsyncpa [#allocation7], 0
    %14 = vsyncpa [#allocation10], 0
    %15 = vsyncpa [#allocation5], 0
    %s16 = scalar_lea.sflag [#allocation5], 1
    %17 = vsyncpa %s16, 0
    loop: start=0, step=1, limit=4
    $region2: #{tpu_custom_call.1} parent=1 // loop_pre_header
      _
    $region3: #{tpu_custom_call.1} parent=1 // loop_header
      %s19 = sphi 0, %s23
      %p20 = scmp.ge.s32.totalorder %s19, 4
      %s26 = sphi 0, %s38
      %s27 = sphi 0, %s34
      %s28 = sphi 0, %s26
      %s29 = sphi 0, %s27
      %s30 = sphi 0, %s28
      %s31 = sphi 0, %s29
      %s41 = sphi 0, %s43
      %s44 = sphi 0, %s41
      %s45 = sphi 0, %s44
      %s61 = sphi 0, %s45
      %s65 = sphi 0, %s65
      %s67 = sphi 0, %s65
      %s68 = sphi 0, %s67
      %s82 = sphi 0, %s68
      %s86 = sphi 0, %s86
      %s88 = sphi 0, %s86
      %s89 = sphi 0, %s88
      %s103 = sphi 0, %s89
      %s107 = sphi 0, %s107
      %s109 = sphi 0, %s107
      %s110 = sphi 0, %s109
      %s124 = sphi 0, %s110
      %s128 = sphi 0, %s128
      %s130 = sphi 0, %s128
      %s131 = sphi 0, %s130
      %s145 = sphi 0, %s131
      %s151 = sphi 0, %s153
      %s154 = sphi 0, %s151
      %s155 = sphi 0, %s154
      %s171 = sphi 0, %s155
    $region4: #{tpu_custom_call.1} parent=1 // loop_header_branch
      %22 = sbr.rel (%p20) target = $region8
    $region5: #{tpu_custom_call.1} parent=1 // loop_body
      %s24 = ssub.s32 %s19, 1
      %s25 = ssub.s32 %s19, 2
      %s32 = sadd.s32 1, %s27
      %p33 = scmp.ge.s32.totalorder %s32, 1
      %s34 = scalar_select %p33, 0, %s32
      %s35 = sadd.s32 1, %s26
      %s36 = scalar_select %p33, %s35, %s26
      %p37 = scmp.ge.s32.totalorder %s36, 2
      %s38 = scalar_select %p37, 0, %s36
      %s39 = ssub.s32 %s26, %s38
      %p40 = scmp.eq.s32.totalorder %s39, 0
      %s42 = sadd.s32 %s41, 1
      %s43 = scalar_select %p40, %s41, %s42
      %p46 = pneg %p40
      %p47 = scmp.eq.s32.totalorder %s19, 1
      %p48 = por %p46, %p47
      %p49 = scmp.ne.s32.totalorder %s41, %s44
      %p50 = scmp.eq.s32.totalorder %s19, 0
      %p51 = por %p49, %p50
      %p52 = scmp.ne.s32.totalorder %s41, %s44
      %p53 = scmp.eq.s32.totalorder %s24, 1
      %p54 = por %p52, %p53
      %p55 = scmp.ne.s32.totalorder %s44, %s45
      %p56 = scmp.eq.s32.totalorder %s24, 0
      %p57 = por %p55, %p56
      %p58 = scmp.ne.s32.totalorder %s44, %s45
      %p59 = scmp.eq.s32.totalorder %s25, 1
      %p60 = por %p58, %p59
      %p62 = scmp.ne.s32.totalorder %s45, %s61
      %p63 = scmp.eq.s32.totalorder %s25, 0
      %p64 = por %p62, %p63
      %s66 = sadd.s32 %s65, 1
      %p69 = scmp.eq.s32.totalorder %s19, 1
      %p70 = scmp.ne.s32.totalorder %s65, %s67
      %p71 = scmp.eq.s32.totalorder %s19, 0
      %p72 = por %p70, %p71
      %p73 = scmp.ne.s32.totalorder %s65, %s67
      %p74 = scmp.eq.s32.totalorder %s24, 1
      %p75 = por %p73, %p74
      %p76 = scmp.ne.s32.totalorder %s67, %s68
      %p77 = scmp.eq.s32.totalorder %s24, 0
      %p78 = por %p76, %p77
      %p79 = scmp.ne.s32.totalorder %s67, %s68
      %p80 = scmp.eq.s32.totalorder %s25, 1
      %p81 = por %p79, %p80
      %p83 = scmp.ne.s32.totalorder %s68, %s82
      %p84 = scmp.eq.s32.totalorder %s25, 0
      %p85 = por %p83, %p84
      %s87 = sadd.s32 %s86, 1
      %p90 = scmp.eq.s32.totalorder %s19, 1
      %p91 = scmp.ne.s32.totalorder %s86, %s88
      %p92 = scmp.eq.s32.totalorder %s19, 0
      %p93 = por %p91, %p92
      %p94 = scmp.ne.s32.totalorder %s86, %s88
      %p95 = scmp.eq.s32.totalorder %s24, 1
      %p96 = por %p94, %p95
      %p97 = scmp.ne.s32.totalorder %s88, %s89
      %p98 = scmp.eq.s32.totalorder %s24, 0
      %p99 = por %p97, %p98
      %p100 = scmp.ne.s32.totalorder %s88, %s89
      %p101 = scmp.eq.s32.totalorder %s25, 1
      %p102 = por %p100, %p101
      %p104 = scmp.ne.s32.totalorder %s89, %s103
      %p105 = scmp.eq.s32.totalorder %s25, 0
      %p106 = por %p104, %p105
      %s108 = sadd.s32 %s107, 1
      %p111 = scmp.eq.s32.totalorder %s19, 1
      %p112 = scmp.ne.s32.totalorder %s107, %s109
      %p113 = scmp.eq.s32.totalorder %s19, 0
      %p114 = por %p112, %p113
      %p115 = scmp.ne.s32.totalorder %s107, %s109
      %p116 = scmp.eq.s32.totalorder %s24, 1
      %p117 = por %p115, %p116
      %p118 = scmp.ne.s32.totalorder %s109, %s110
      %p119 = scmp.eq.s32.totalorder %s24, 0
      %p120 = por %p118, %p119
      %p121 = scmp.ne.s32.totalorder %s109, %s110
      %p122 = scmp.eq.s32.totalorder %s25, 1
      %p123 = por %p121, %p122
      %p125 = scmp.ne.s32.totalorder %s110, %s124
      %p126 = scmp.eq.s32.totalorder %s25, 0
      %p127 = por %p125, %p126
      %s129 = sadd.s32 %s128, 1
      %p132 = scmp.eq.s32.totalorder %s19, 1
      %p133 = scmp.ne.s32.totalorder %s128, %s130
      %p134 = scmp.eq.s32.totalorder %s19, 0
      %p135 = por %p133, %p134
      %p136 = scmp.ne.s32.totalorder %s128, %s130
      %p137 = scmp.eq.s32.totalorder %s24, 1
      %p138 = por %p136, %p137
      %p139 = scmp.ne.s32.totalorder %s130, %s131
      %p140 = scmp.eq.s32.totalorder %s24, 0
      %p141 = por %p139, %p140
      %p142 = scmp.ne.s32.totalorder %s130, %s131
      %p143 = scmp.eq.s32.totalorder %s25, 1
      %p144 = por %p142, %p143
      %p146 = scmp.ne.s32.totalorder %s131, %s145
      %p147 = scmp.eq.s32.totalorder %s25, 0
      %p148 = por %p146, %p147
      %s149 = ssub.s32 %s26, %s38
      %p150 = scmp.eq.s32.totalorder %s149, 0
      %s152 = sadd.s32 %s151, 1
      %s153 = scalar_select %p150, %s151, %s152
      %p156 = pneg %p150
      %p157 = scmp.eq.s32.totalorder %s19, 1
      %p158 = por %p156, %p157
      %p159 = scmp.ne.s32.totalorder %s151, %s154
      %p160 = scmp.eq.s32.totalorder %s19, 0
      %p161 = por %p159, %p160
      %p162 = scmp.ne.s32.totalorder %s151, %s154
      %p163 = scmp.eq.s32.totalorder %s24, 1
      %p164 = por %p162, %p163
      %p165 = scmp.ne.s32.totalorder %s154, %s155
      %p166 = scmp.eq.s32.totalorder %s24, 0
      %p167 = por %p165, %p166
      %p168 = scmp.ne.s32.totalorder %s154, %s155
      %p169 = scmp.eq.s32.totalorder %s25, 1
      %p170 = por %p168, %p169
      %p172 = scmp.ne.s32.totalorder %s155, %s171
      %p173 = scmp.eq.s32.totalorder %s25, 0
      %p174 = por %p172, %p173
      %p175 = scmp.le.s32.totalorder 1, %s19
      %p176 = scmp.lt.s32.totalorder %s19, 3
      %p177 = pnand %p175, %p176
      %p178 = pneg %p177
      // Predicated region
      $region9: #{tpu_custom_call.1} parent=5 // pred_check
        _
      $region10: #{tpu_custom_call.1} parent=5 // pred_check_branch
        %180 = sbr.rel (%p177) target = $region12
      $region11: #{tpu_custom_call.1} parent=5 // pred_region
        %s181 = ssub.s32 %s19, 1
        // Predicated region
        $region13: #{tpu_custom_call.1} parent=11 // pred_check
          %p182 = pneg %p78
        $region14: #{tpu_custom_call.1} parent=11 // pred_check_branch
          %184 = sbr.rel (%p182) target = $region16
        $region15: #{tpu_custom_call.1} parent=11 // pred_region
          %s186 = ssub.s32 8192, 8192
          %187 = vsyncadd [#allocation7], %s186
          %s188 = sshll.u32 [#allocation6], 4
          %s189 = int_to_ptr.vmem [resolvable:$true] %s188
          %194 = dma.hbm_to_vmem [thread:$0]  %s1, 8192, %s189, [#allocation7], 512, 512, 32
        $region16: #{tpu_custom_call.1} parent=11 // pred_fallthru
          _
        // Predicated region
        $region17: #{tpu_custom_call.1} parent=11 // pred_check
          %p195 = pneg %p99
        $region18: #{tpu_custom_call.1} parent=11 // pred_check_branch
          %197 = sbr.rel (%p195) target = $region20
        $region19: #{tpu_custom_call.1} parent=11 // pred_region
          %s199 = ssub.s32 64, 64
          %200 = vsyncadd [#allocation7], %s199
          %s202 = sshll.u32 [#allocation8], 4
          %s203 = int_to_ptr.vmem [resolvable:$true] %s202
          %205 = dma.hbm_to_vmem [thread:$0]  %s2, 64, %s203, [#allocation7]
        $region20: #{tpu_custom_call.1} parent=11 // pred_fallthru
          _
        // Predicated region
        $region21: #{tpu_custom_call.1} parent=11 // pred_check
          %p206 = pneg %p120
        $region22: #{tpu_custom_call.1} parent=11 // pred_check_branch
          %208 = sbr.rel (%p206) target = $region24
        $region23: #{tpu_custom_call.1} parent=11 // pred_region
          %s210 = ssub.s32 8192, 8192
          %211 = vsyncadd [#allocation10], %s210
          %s212 = sshll.u32 [#allocation9], 4
          %s213 = int_to_ptr.vmem [resolvable:$true] %s212
          %218 = dma.hbm_to_vmem [thread:$0]  %s3, 8192, %s213, [#allocation10], 128, 128, 8
        $region24: #{tpu_custom_call.1} parent=11 // pred_fallthru
          _
        // Predicated region
        $region25: #{tpu_custom_call.1} parent=11 // pred_check
          %p219 = pneg %p141
        $region26: #{tpu_custom_call.1} parent=11 // pred_check_branch
          %221 = sbr.rel (%p219) target = $region28
        $region27: #{tpu_custom_call.1} parent=11 // pred_region
          %s223 = ssub.s32 16, 16
          %224 = vsyncadd [#allocation10], %s223
          %s226 = sshll.u32 [#allocation11], 4
          %s227 = int_to_ptr.vmem [resolvable:$true] %s226
          %229 = dma.hbm_to_vmem [thread:$0]  %s4, 16, %s227, [#allocation10]
        $region28: #{tpu_custom_call.1} parent=11 // pred_fallthru
          _
      $region12: #{tpu_custom_call.1} parent=5 // pred_fallthru
        _
      %p230 = scmp.lt.s32.totalorder %s19, 2
      // Predicated region
      $region29: #{tpu_custom_call.1} parent=5 // pred_check
        %p231 = pneg %p230
      $region30: #{tpu_custom_call.1} parent=5 // pred_check_branch
        %233 = sbr.rel (%p231) target = $region32
      $region31: #{tpu_custom_call.1} parent=5 // pred_region
        // Predicated region
        $region33: #{tpu_custom_call.1} parent=31 // pred_check
          %p234 = pneg %p51
        $region34: #{tpu_custom_call.1} parent=31 // pred_check_branch
          %236 = sbr.rel (%p234) target = $region36
        $region35: #{tpu_custom_call.1} parent=31 // pred_region
          %s237 = sand.u32 %s41, 1
          %s238 = scalar_lea.sflag [#allocation4], %s237
          %s239 = sand.u32 %s41, 1
          %s240 = smul.addr %s239, 8
          %s241 = scalar_lea.vmem [#allocation3], %s240
          %s243 = ssub.s32 128, 128
          %244 = vsyncadd %s238, %s243
          %s245 = smul.addr %s26, 128
          %s246 = scalar_lea.hbm %s0, %s245
          %s248 = sshll.u32 %s241, 4
          %s249 = int_to_ptr.vmem [resolvable:$true] %s248
          %251 = dma.hbm_to_vmem [thread:$0]  %s246, 128, %s249, %s238
        $region36: #{tpu_custom_call.1} parent=31 // pred_fallthru
          _
      $region32: #{tpu_custom_call.1} parent=5 // pred_fallthru
        _
      %p252 = scmp.le.s32.totalorder 1, %s19
      %p253 = scmp.lt.s32.totalorder %s19, 3
      %p254 = pnand %p252, %p253
      %p255 = pneg %p254
      // Predicated region
      $region37: #{tpu_custom_call.1} parent=5 // pred_check
        _
      $region38: #{tpu_custom_call.1} parent=5 // pred_check_branch
        %257 = sbr.rel (%p254) target = $region40
      $region39: #{tpu_custom_call.1} parent=5 // pred_region
        %s258 = ssub.s32 %s19, 1
        %s259 = sand.u32 %s44, 1
        %s260 = scalar_lea.sflag [#allocation4], %s259
        %s261 = sand.u32 %s44, 1
        %s262 = smul.addr %s261, 8
        %s263 = scalar_lea.vmem [#allocation3], %s262
        // Predicated region
        $region41: #{tpu_custom_call.1} parent=39 // pred_check
          %p264 = pneg %p57
        $region42: #{tpu_custom_call.1} parent=39 // pred_check_branch
          %266 = sbr.rel (%p264) target = $region44
        $region43: #{tpu_custom_call.1} parent=39 // pred_region
          %267 = dma.done %s260, 128
        $region44: #{tpu_custom_call.1} parent=39 // pred_fallthru
          _
        // Predicated region
        $region45: #{tpu_custom_call.1} parent=39 // pred_check
          %p268 = pneg %p78
        $region46: #{tpu_custom_call.1} parent=39 // pred_check_branch
          %270 = sbr.rel (%p268) target = $region48
        $region47: #{tpu_custom_call.1} parent=39 // pred_region
          %271 = dma.done [#allocation7], 8192
        $region48: #{tpu_custom_call.1} parent=39 // pred_fallthru
          _
        // Predicated region
        $region49: #{tpu_custom_call.1} parent=39 // pred_check
          %p272 = pneg %p99
        $region50: #{tpu_custom_call.1} parent=39 // pred_check_branch
          %274 = sbr.rel (%p272) target = $region52
        $region51: #{tpu_custom_call.1} parent=39 // pred_region
          %275 = dma.done [#allocation7], 64
        $region52: #{tpu_custom_call.1} parent=39 // pred_fallthru
          _
        // Predicated region
        $region53: #{tpu_custom_call.1} parent=39 // pred_check
          %p276 = pneg %p120
        $region54: #{tpu_custom_call.1} parent=39 // pred_check_branch
          %278 = sbr.rel (%p276) target = $region56
        $region55: #{tpu_custom_call.1} parent=39 // pred_region
          %279 = dma.done [#allocation10], 8192
        $region56: #{tpu_custom_call.1} parent=39 // pred_fallthru
          _
        // Predicated region
        $region57: #{tpu_custom_call.1} parent=39 // pred_check
          %p280 = pneg %p141
        $region58: #{tpu_custom_call.1} parent=39 // pred_check_branch
          %282 = sbr.rel (%p280) target = $region60
        $region59: #{tpu_custom_call.1} parent=39 // pred_region
          %283 = dma.done [#allocation10], 16
        $region60: #{tpu_custom_call.1} parent=39 // pred_fallthru
          _
        %s284 = sand.u32 %s44, 1
        %s285 = scalar_lea.sflag [#allocation4], %s284
        %s286 = sand.u32 %s44, 1
        %s287 = smul.addr %s286, 8
        %s288 = scalar_lea.vmem [#allocation3], %s287
        %p289 = pneg %p57
        %p290 = pneg %p54
        %p291 = pneg %p78
        %p292 = pneg %p75
        %p293 = pneg %p99
        %p294 = pneg %p96
        %p295 = pneg %p120
        %p296 = pneg %p117
        %p297 = pneg %p141
        %p298 = pneg %p138
        %p299 = pneg %p167
        %p300 = pneg %p164
        %s301 = sand.u32 %s154, 1
        %s302 = scalar_lea.sflag [#allocation5], %s301
        %s303 = sand.u32 %s154, 1
        %s304 = smul.addr %s303, 8
        %s305 = scalar_lea.vmem [#allocation12], %s304
        %p306 = scmp.eq.s32.totalorder %s29, 0
        // Predicated region
        $region61: #{tpu_custom_call.1} parent=39 // pred_check
          %p307 = pneg %p306
        $region62: #{tpu_custom_call.1} parent=39 // pred_check_branch
          %309 = sbr.rel (%p307) target = $region64
        $region63: #{tpu_custom_call.1} parent=39 // pred_region
          %v310 = vld [vmem:[#allocation11] sm:$0x1]
          %v312 = vlaneseq
          %v313 = vshrl.u32 %v312, 7
          %v314 = vsub.s32 0, %v313
          %v315 = vrot.slane %v310, %v314
          %317 = vst [vmem:[#allocation2] sm:$0xff] %v315
        $region64: #{tpu_custom_call.1} parent=39 // pred_fallthru
          _
        %s318 = smul.u32 %s29, 512
        %s319 = sshra.s32 %s318, 7
        %s320 = sand.u32 %s318, 127
        %s321 = smul.addr %s319, 8
        %s322 = scalar_lea.vmem [#allocation6], %s321
        %v323 = vld [vmem:[%s322] sm:$0xff]
        %v324 = vld [vmem:[%s322 + $0x8] sm:$0xff]
        %v325 = vld [vmem:[%s322 + $0x10] sm:$0xff]
        %v326 = vld [vmem:[%s322 + $0x18] sm:$0xff]
        %v327 = vld [vmem:[%s322 + $0x20] sm:$0xff]
        %v328 = vld [vmem:[%s322 + $0x28] sm:$0xff]
        %v329 = vld [vmem:[%s322 + $0x30] sm:$0xff]
        %v330 = vld [vmem:[%s322 + $0x38] sm:$0xff]
        %v331 = vld [vmem:[%s322 + $0x40] sm:$0xff]
        %v332 = vld [vmem:[%s322 + $0x48] sm:$0xff]
        %v333 = vld [vmem:[%s322 + $0x50] sm:$0xff]
        %v334 = vld [vmem:[%s322 + $0x58] sm:$0xff]
        %v335 = vld [vmem:[%s322 + $0x60] sm:$0xff]
        %v336 = vld [vmem:[%s322 + $0x68] sm:$0xff]
        %v337 = vld [vmem:[%s322 + $0x70] sm:$0xff]
        %v338 = vld [vmem:[%s322 + $0x78] sm:$0xff]
        %v339 = vld [vmem:[%s322 + $0x80] sm:$0xff]
        %v340 = vld [vmem:[%s322 + $0x88] sm:$0xff]
        %v341 = vld [vmem:[%s322 + $0x90] sm:$0xff]
        %v342 = vld [vmem:[%s322 + $0x98] sm:$0xff]
        %v343 = vld [vmem:[%s322 + $0xa0] sm:$0xff]
        %v344 = vld [vmem:[%s322 + $0xa8] sm:$0xff]
        %v345 = vld [vmem:[%s322 + $0xb0] sm:$0xff]
        %v346 = vld [vmem:[%s322 + $0xb8] sm:$0xff]
        %v347 = vld [vmem:[%s322 + $0xc0] sm:$0xff]
        %v348 = vld [vmem:[%s322 + $0xc8] sm:$0xff]
        %v349 = vld [vmem:[%s322 + $0xd0] sm:$0xff]
        %v350 = vld [vmem:[%s322 + $0xd8] sm:$0xff]
        %v351 = vld [vmem:[%s322 + $0xe0] sm:$0xff]
        %v352 = vld [vmem:[%s322 + $0xe8] sm:$0xff]
        %v353 = vld [vmem:[%s322 + $0xf0] sm:$0xff]
        %v354 = vld [vmem:[%s322 + $0xf8] sm:$0xff]
        %v355 = vld [vmem:[%s322 + $0x100] sm:$0xff]
        %v356 = vld [vmem:[%s322 + $0x108] sm:$0xff]
        %v357 = vld [vmem:[%s322 + $0x110] sm:$0xff]
        %v358 = vld [vmem:[%s322 + $0x118] sm:$0xff]
        %v359 = vld [vmem:[%s322 + $0x120] sm:$0xff]
        %v360 = vld [vmem:[%s322 + $0x128] sm:$0xff]
        %v361 = vld [vmem:[%s322 + $0x130] sm:$0xff]
        %v362 = vld [vmem:[%s322 + $0x138] sm:$0xff]
        %v363 = vld [vmem:[%s322 + $0x140] sm:$0xff]
        %v364 = vld [vmem:[%s322 + $0x148] sm:$0xff]
        %v365 = vld [vmem:[%s322 + $0x150] sm:$0xff]
        %v366 = vld [vmem:[%s322 + $0x158] sm:$0xff]
        %v367 = vld [vmem:[%s322 + $0x160] sm:$0xff]
        %v368 = vld [vmem:[%s322 + $0x168] sm:$0xff]
        %v369 = vld [vmem:[%s322 + $0x170] sm:$0xff]
        %v370 = vld [vmem:[%s322 + $0x178] sm:$0xff]
        %v371 = vld [vmem:[%s322 + $0x180] sm:$0xff]
        %v372 = vld [vmem:[%s322 + $0x188] sm:$0xff]
        %v373 = vld [vmem:[%s322 + $0x190] sm:$0xff]
        %v374 = vld [vmem:[%s322 + $0x198] sm:$0xff]
        %v375 = vld [vmem:[%s322 + $0x1a0] sm:$0xff]
        %v376 = vld [vmem:[%s322 + $0x1a8] sm:$0xff]
        %v377 = vld [vmem:[%s322 + $0x1b0] sm:$0xff]
        %v378 = vld [vmem:[%s322 + $0x1b8] sm:$0xff]
        %v379 = vld [vmem:[%s322 + $0x1c0] sm:$0xff]
        %v380 = vld [vmem:[%s322 + $0x1c8] sm:$0xff]
        %v381 = vld [vmem:[%s322 + $0x1d0] sm:$0xff]
        %v382 = vld [vmem:[%s322 + $0x1d8] sm:$0xff]
        %v383 = vld [vmem:[%s322 + $0x1e0] sm:$0xff]
        %v384 = vld [vmem:[%s322 + $0x1e8] sm:$0xff]
        %v385 = vld [vmem:[%s322 + $0x1f0] sm:$0xff]
        %v386 = vld [vmem:[%s322 + $0x1f8] sm:$0xff]
        %s387 = scalar_lea.vmem [#allocation8], %s319
        %v388 = vld [vmem:[%s387] sm:$0xf]
        %s389 = scalar_lea.vmem [#allocation9], %s318
        %v390 = vld [vmem:[%s389] sm:$0xff]
        %v391 = vld [vmem:[%s389 + $0x8] sm:$0xff]
        %v392 = vld [vmem:[%s389 + $0x10] sm:$0xff]
        %v393 = vld [vmem:[%s389 + $0x18] sm:$0xff]
        %v394 = vld [vmem:[%s389 + $0x20] sm:$0xff]
        %v395 = vld [vmem:[%s389 + $0x28] sm:$0xff]
        %v396 = vld [vmem:[%s389 + $0x30] sm:$0xff]
        %v397 = vld [vmem:[%s389 + $0x38] sm:$0xff]
        %v398 = vld [vmem:[%s389 + $0x40] sm:$0xff]
        %v399 = vld [vmem:[%s389 + $0x48] sm:$0xff]
        %v400 = vld [vmem:[%s389 + $0x50] sm:$0xff]
        %v401 = vld [vmem:[%s389 + $0x58] sm:$0xff]
        %v402 = vld [vmem:[%s389 + $0x60] sm:$0xff]
        %v403 = vld [vmem:[%s389 + $0x68] sm:$0xff]
        %v404 = vld [vmem:[%s389 + $0x70] sm:$0xff]
        %v405 = vld [vmem:[%s389 + $0x78] sm:$0xff]
        %v406 = vld [vmem:[%s389 + $0x80] sm:$0xff]
        %v407 = vld [vmem:[%s389 + $0x88] sm:$0xff]
        %v408 = vld [vmem:[%s389 + $0x90] sm:$0xff]
        %v409 = vld [vmem:[%s389 + $0x98] sm:$0xff]
        %v410 = vld [vmem:[%s389 + $0xa0] sm:$0xff]
        %v411 = vld [vmem:[%s389 + $0xa8] sm:$0xff]
        %v412 = vld [vmem:[%s389 + $0xb0] sm:$0xff]
        %v413 = vld [vmem:[%s389 + $0xb8] sm:$0xff]
        %v414 = vld [vmem:[%s389 + $0xc0] sm:$0xff]
        %v415 = vld [vmem:[%s389 + $0xc8] sm:$0xff]
        %v416 = vld [vmem:[%s389 + $0xd0] sm:$0xff]
        %v417 = vld [vmem:[%s389 + $0xd8] sm:$0xff]
        %v418 = vld [vmem:[%s389 + $0xe0] sm:$0xff]
        %v419 = vld [vmem:[%s389 + $0xe8] sm:$0xff]
        %v420 = vld [vmem:[%s389 + $0xf0] sm:$0xff]
        %v421 = vld [vmem:[%s389 + $0xf8] sm:$0xff]
        %v422 = vld [vmem:[%s389 + $0x100] sm:$0xff]
        %v423 = vld [vmem:[%s389 + $0x108] sm:$0xff]
        %v424 = vld [vmem:[%s389 + $0x110] sm:$0xff]
        %v425 = vld [vmem:[%s389 + $0x118] sm:$0xff]
        %v426 = vld [vmem:[%s389 + $0x120] sm:$0xff]
        %v427 = vld [vmem:[%s389 + $0x128] sm:$0xff]
        %v428 = vld [vmem:[%s389 + $0x130] sm:$0xff]
        %v429 = vld [vmem:[%s389 + $0x138] sm:$0xff]
        %v430 = vld [vmem:[%s389 + $0x140] sm:$0xff]
        %v431 = vld [vmem:[%s389 + $0x148] sm:$0xff]
        %v432 = vld [vmem:[%s389 + $0x150] sm:$0xff]
        %v433 = vld [vmem:[%s389 + $0x158] sm:$0xff]
        %v434 = vld [vmem:[%s389 + $0x160] sm:$0xff]
        %v435 = vld [vmem:[%s389 + $0x168] sm:$0xff]
        %v436 = vld [vmem:[%s389 + $0x170] sm:$0xff]
        %v437 = vld [vmem:[%s389 + $0x178] sm:$0xff]
        %v438 = vld [vmem:[%s389 + $0x180] sm:$0xff]
        %v439 = vld [vmem:[%s389 + $0x188] sm:$0xff]
        %v440 = vld [vmem:[%s389 + $0x190] sm:$0xff]
        %v441 = vld [vmem:[%s389 + $0x198] sm:$0xff]
        %v442 = vld [vmem:[%s389 + $0x1a0] sm:$0xff]
        %v443 = vld [vmem:[%s389 + $0x1a8] sm:$0xff]
        %v444 = vld [vmem:[%s389 + $0x1b0] sm:$0xff]
        %v445 = vld [vmem:[%s389 + $0x1b8] sm:$0xff]
        %v446 = vld [vmem:[%s389 + $0x1c0] sm:$0xff]
        %v447 = vld [vmem:[%s389 + $0x1c8] sm:$0xff]
        %v448 = vld [vmem:[%s389 + $0x1d0] sm:$0xff]
        %v449 = vld [vmem:[%s389 + $0x1d8] sm:$0xff]
        %v450 = vld [vmem:[%s389 + $0x1e0] sm:$0xff]
        %v451 = vld [vmem:[%s389 + $0x1e8] sm:$0xff]
        %v452 = vld [vmem:[%s389 + $0x1f0] sm:$0xff]
        %v453 = vld [vmem:[%s389 + $0x1f8] sm:$0xff]
        %v454 = vld [vmem:[%s263] sm:$0xff]
        %v456 = vlaneseq
        %v457 = vshrl.u32 %v456, 7
        %v458 = vsub.s32 0, %v457
        %v459 = vrot.slane %v388, %v458
        %v460 = vlaneseq
        %v461 = vshrl.u32 %v460, 7
        %v462 = vsub.s32 1, %v461
        %v463 = vrot.slane %v388, %v462
        %v464 = vlaneseq
        %v465 = vshrl.u32 %v464, 7
        %v466 = vsub.s32 2, %v465
        %v467 = vrot.slane %v388, %v466
        %v468 = vlaneseq
        %v469 = vshrl.u32 %v468, 7
        %v470 = vsub.s32 3, %v469
        %v471 = vrot.slane %v388, %v470
        %476 = vmatprep.subr.mxu0 %v324
        %477 = vmatpush1.msra.mxu0 %v323
        %478 = vmatprep.subr.mxu0 %v328
        %479 = vmatpush1.msra.mxu0 %v327
        %480 = vmatprep.subr.mxu0 %v332
        %481 = vmatpush1.msra.mxu0 %v331
        %482 = vmatprep.subr.mxu0 %v336
        %483 = vmatpush1.msra.mxu0 %v335
        %484 = vmatprep.subr.mxu0 %v340
        %485 = vmatpush1.msra.mxu0 %v339
        %486 = vmatprep.subr.mxu0 %v344
        %487 = vmatpush1.msra.mxu0 %v343
        %488 = vmatprep.subr.mxu0 %v348
        %489 = vmatpush1.msra.mxu0 %v347
        %490 = vmatprep.subr.mxu0 %v352
        %491 = vmatpush1.msra.mxu0 %v351
        %492 = vmatprep.subr.mxu0 %v356
        %493 = vmatpush1.msra.mxu0 %v355
        %494 = vmatprep.subr.mxu0 %v360
        %495 = vmatpush1.msra.mxu0 %v359
        %496 = vmatprep.subr.mxu0 %v364
        %497 = vmatpush1.msra.mxu0 %v363
        %498 = vmatprep.subr.mxu0 %v368
        %499 = vmatpush1.msra.mxu0 %v367
        %500 = vmatprep.subr.mxu0 %v372
        %501 = vmatpush1.msra.mxu0 %v371
        %502 = vmatprep.subr.mxu0 %v376
        %503 = vmatpush1.msra.mxu0 %v375
        %504 = vmatprep.subr.mxu0 %v380
        %505 = vmatpush1.msra.mxu0 %v379
        %506 = vmatprep.subr.mxu0 %v384
        %507 = vmatpush1.msra.mxu0 %v383
        %508 = vmatprep.subr.mxu0 0.0
        %509 = vmatpush1.msra.mxu0 0.0
        %510 = vmatprep.subr.mxu0 0.0
        %511 = vmatpush1.msra.mxu0 0.0
        %512 = vmatprep.subr.mxu0 0.0
        %513 = vmatpush1.msra.mxu0 0.0
        %514 = vmatprep.subr.mxu0 0.0
        %515 = vmatpush1.msra.mxu0 0.0
        %516 = vmatprep.subr.mxu0 0.0
        %517 = vmatpush1.msra.mxu0 0.0
        %518 = vmatprep.subr.mxu0 0.0
        %519 = vmatpush1.msra.mxu0 0.0
        %520 = vmatprep.subr.mxu0 0.0
        %521 = vmatpush1.msra.mxu0 0.0
        %522 = vmatprep.subr.mxu0 0.0
        %523 = vmatpush1.msra.mxu0 0.0
        %524 = vmatprep.subr.mxu0 0.0
        %525 = vmatpush1.msra.mxu0 0.0
        %526 = vmatprep.subr.mxu0 0.0
        %527 = vmatpush1.msra.mxu0 0.0
        %528 = vmatprep.subr.mxu0 0.0
        %529 = vmatpush1.msra.mxu0 0.0
        %530 = vmatprep.subr.mxu0 0.0
        %531 = vmatpush1.msra.mxu0 0.0
        %532 = vmatprep.subr.mxu0 0.0
        %533 = vmatpush1.msra.mxu0 0.0
        %534 = vmatprep.subr.mxu0 0.0
        %535 = vmatpush1.msra.mxu0 0.0
        %536 = vmatprep.subr.mxu0 0.0
        %537 = vmatpush1.msra.mxu0 0.0
        %538 = vmatprep.subr.mxu0 0.0
        %539 = vmatpush1.msra.mxu0 0.0
        %540 = vmatprep.mubr.f32.mxu0 0.0
        %541 = vmatmul.mubr.f32.gmra.mrb[0].mxu0 %v454
        %v542 = vpop.f32.mrb[0].mxu0
        %v543 = vadd.f32 %v459, %v542
        %v544 = vpop.f32.mrb[0].mxu0
        %v545 = vadd.f32 %v463, %v544
        %546 = vdwg.mxu0
        %547 = vmatprep.subr.mxu0 %v326
        %548 = vmatpush1.msra.mxu0 %v325
        %549 = vmatprep.subr.mxu0 %v330
        %550 = vmatpush1.msra.mxu0 %v329
        %551 = vmatprep.subr.mxu0 %v334
        %552 = vmatpush1.msra.mxu0 %v333
        %553 = vmatprep.subr.mxu0 %v338
        %554 = vmatpush1.msra.mxu0 %v337
        %555 = vmatprep.subr.mxu0 %v342
        %556 = vmatpush1.msra.mxu0 %v341
        %557 = vmatprep.subr.mxu0 %v346
        %558 = vmatpush1.msra.mxu0 %v345
        %559 = vmatprep.subr.mxu0 %v350
        %560 = vmatpush1.msra.mxu0 %v349
        %561 = vmatprep.subr.mxu0 %v354
        %562 = vmatpush1.msra.mxu0 %v353
        %563 = vmatprep.subr.mxu0 %v358
        %564 = vmatpush1.msra.mxu0 %v357
        %565 = vmatprep.subr.mxu0 %v362
        %566 = vmatpush1.msra.mxu0 %v361
        %567 = vmatprep.subr.mxu0 %v366
        %568 = vmatpush1.msra.mxu0 %v365
        %569 = vmatprep.subr.mxu0 %v370
        %570 = vmatpush1.msra.mxu0 %v369
        %571 = vmatprep.subr.mxu0 %v374
        %572 = vmatpush1.msra.mxu0 %v373
        %573 = vmatprep.subr.mxu0 %v378
        %574 = vmatpush1.msra.mxu0 %v377
        %575 = vmatprep.subr.mxu0 %v382
        %576 = vmatpush1.msra.mxu0 %v381
        %577 = vmatprep.subr.mxu0 %v386
        %578 = vmatpush1.msra.mxu0 %v385
        %579 = vmatprep.subr.mxu0 0.0
        %580 = vmatpush1.msra.mxu0 0.0
        %581 = vmatprep.subr.mxu0 0.0
        %582 = vmatpush1.msra.mxu0 0.0
        %583 = vmatprep.subr.mxu0 0.0
        %584 = vmatpush1.msra.mxu0 0.0
        %585 = vmatprep.subr.mxu0 0.0
        %586 = vmatpush1.msra.mxu0 0.0
        %587 = vmatprep.subr.mxu0 0.0
        %588 = vmatpush1.msra.mxu0 0.0
        %589 = vmatprep.subr.mxu0 0.0
        %590 = vmatpush1.msra.mxu0 0.0
        %591 = vmatprep.subr.mxu0 0.0
        %592 = vmatpush1.msra.mxu0 0.0
        %593 = vmatprep.subr.mxu0 0.0
        %594 = vmatpush1.msra.mxu0 0.0
        %595 = vmatprep.subr.mxu0 0.0
        %596 = vmatpush1.msra.mxu0 0.0
        %597 = vmatprep.subr.mxu0 0.0
        %598 = vmatpush1.msra.mxu0 0.0
        %599 = vmatprep.subr.mxu0 0.0
        %600 = vmatpush1.msra.mxu0 0.0
        %601 = vmatprep.subr.mxu0 0.0
        %602 = vmatpush1.msra.mxu0 0.0
        %603 = vmatprep.subr.mxu0 0.0
        %604 = vmatpush1.msra.mxu0 0.0
        %605 = vmatprep.subr.mxu0 0.0
        %606 = vmatpush1.msra.mxu0 0.0
        %607 = vmatprep.subr.mxu0 0.0
        %608 = vmatpush1.msra.mxu0 0.0
        %609 = vmatprep.subr.mxu0 0.0
        %610 = vmatpush1.msra.mxu0 0.0
        %611 = vmatprep.mubr.f32.mxu0 0.0
        %612 = vmatmul.mubr.f32.gmra.mrb[0].mxu0 %v454
        %v613 = vpop.f32.mrb[0].mxu0
        %v614 = vadd.f32 %v467, %v613
        %v615 = vpop.f32.mrb[0].mxu0
        %v616 = vadd.f32 %v471, %v615
        %617 = vdwg.mxu0
        %v618 = vmul.f32 %v543, %v543
        %v619 = vmul.f32 %v545, %v545
        %v620 = vmul.f32 %v614, %v614
        %v621 = vmul.f32 %v616, %v616
        %v622 = vmul.f32 %v543, 0.5
        %v623 = vmul.f32 %v545, 0.5
        %v624 = vmul.f32 %v614, 0.5
        %v625 = vmul.f32 %v616, 0.5
        %v626 = vmul.f32 %v543, 0.7978846
        %v627 = vmul.f32 %v545, 0.7978846
        %v628 = vmul.f32 %v614, 0.7978846
        %v629 = vmul.f32 %v616, 0.7978846
        %v630 = vmul.f32 %v618, 0.044715
        %v631 = vmul.f32 %v619, 0.044715
        %v632 = vmul.f32 %v620, 0.044715
        %v633 = vmul.f32 %v621, 0.044715
        %v634 = vadd.f32 %v630, 1.0
        %v635 = vadd.f32 %v631, 1.0
        %v636 = vadd.f32 %v632, 1.0
        %v637 = vadd.f32 %v633, 1.0
        %v638 = vmul.f32 %v626, %v634
        %v639 = vmul.f32 %v627, %v635
        %v640 = vmul.f32 %v628, %v636
        %v641 = vmul.f32 %v629, %v637
        %v642 = vtanh.pop %v638
        %v643 = vtanh.pop %v639
        %v644 = vtanh.pop %v640
        %v645 = vtanh.pop %v641
        %v646 = vadd.f32 %v642, 1.0
        %v647 = vadd.f32 %v643, 1.0
        %v648 = vadd.f32 %v644, 1.0
        %v649 = vadd.f32 %v645, 1.0
        %v650 = vmul.f32 %v622, %v646
        %v651 = vmul.f32 %v623, %v647
        %v652 = vmul.f32 %v624, %v648
        %v653 = vmul.f32 %v625, %v649
        %v654 = vld [vmem:[#allocation2] sm:$0xff]
        %655 = vmatprep.subr.mxu0 0.0
        %656 = vmatpush1.msra.mxu0 %v390
        %657 = vmatprep.subr.mxu0 0.0
        %658 = vmatpush1.msra.mxu0 %v391
        %659 = vmatprep.subr.mxu0 0.0
        %660 = vmatpush1.msra.mxu0 %v392
        %661 = vmatprep.subr.mxu0 0.0
        %662 = vmatpush1.msra.mxu0 %v393
        %663 = vmatprep.subr.mxu0 0.0
        %664 = vmatpush1.msra.mxu0 %v394
        %665 = vmatprep.subr.mxu0 0.0
        %666 = vmatpush1.msra.mxu0 %v395
        %667 = vmatprep.subr.mxu0 0.0
        %668 = vmatpush1.msra.mxu0 %v396
        %669 = vmatprep.subr.mxu0 0.0
        %670 = vmatpush1.msra.mxu0 %v397
        %671 = vmatprep.subr.mxu0 0.0
        %672 = vmatpush1.msra.mxu0 %v398
        %673 = vmatprep.subr.mxu0 0.0
        %674 = vmatpush1.msra.mxu0 %v399
        %675 = vmatprep.subr.mxu0 0.0
        %676 = vmatpush1.msra.mxu0 %v400
        %677 = vmatprep.subr.mxu0 0.0
        %678 = vmatpush1.msra.mxu0 %v401
        %679 = vmatprep.subr.mxu0 0.0
        %680 = vmatpush1.msra.mxu0 %v402
        %681 = vmatprep.subr.mxu0 0.0
        %682 = vmatpush1.msra.mxu0 %v403
        %683 = vmatprep.subr.mxu0 0.0
        %684 = vmatpush1.msra.mxu0 %v404
        %685 = vmatprep.subr.mxu0 0.0
        %686 = vmatpush1.msra.mxu0 %v405
        %687 = vmatprep.subr.mxu0 0.0
        %688 = vmatpush1.msra.mxu0 %v406
        %689 = vmatprep.subr.mxu0 0.0
        %690 = vmatpush1.msra.mxu0 %v407
        %691 = vmatprep.subr.mxu0 0.0
        %692 = vmatpush1.msra.mxu0 %v408
        %693 = vmatprep.subr.mxu0 0.0
        %694 = vmatpush1.msra.mxu0 %v409
        %695 = vmatprep.subr.mxu0 0.0
        %696 = vmatpush1.msra.mxu0 %v410
        %697 = vmatprep.subr.mxu0 0.0
        %698 = vmatpush1.msra.mxu0 %v411
        %699 = vmatprep.subr.mxu0 0.0
        %700 = vmatpush1.msra.mxu0 %v412
        %701 = vmatprep.subr.mxu0 0.0
        %702 = vmatpush1.msra.mxu0 %v413
        %703 = vmatprep.subr.mxu0 0.0
        %704 = vmatpush1.msra.mxu0 %v414
        %705 = vmatprep.subr.mxu0 0.0
        %706 = vmatpush1.msra.mxu0 %v415
        %707 = vmatprep.subr.mxu0 0.0
        %708 = vmatpush1.msra.mxu0 %v416
        %709 = vmatprep.subr.mxu0 0.0
        %710 = vmatpush1.msra.mxu0 %v417
        %711 = vmatprep.subr.mxu0 0.0
        %712 = vmatpush1.msra.mxu0 %v418
        %713 = vmatprep.subr.mxu0 0.0
        %714 = vmatpush1.msra.mxu0 %v419
        %715 = vmatprep.subr.mxu0 0.0
        %716 = vmatpush1.msra.mxu0 %v420
        %717 = vmatprep.subr.mxu0 0.0
        %718 = vmatpush1.msra.mxu0 %v421
        %719 = vmatprep.mubr.f32.mxu0 %v651
        %720 = vmatmul.mubr.f32.gmra.mrb[0].mxu0 %v650
        %v721 = vpop.f32.mrb[0].mxu0
        %v722 = vadd.f32 0.0, %v721
        %v723 = vpop.f32.mrb[0].mxu0
        %724 = vdwg.mxu0
        %725 = vmatprep.subr.mxu0 0.0
        %726 = vmatpush1.msra.mxu0 %v422
        %727 = vmatprep.subr.mxu0 0.0
        %728 = vmatpush1.msra.mxu0 %v423
        %729 = vmatprep.subr.mxu0 0.0
        %730 = vmatpush1.msra.mxu0 %v424
        %731 = vmatprep.subr.mxu0 0.0
        %732 = vmatpush1.msra.mxu0 %v425
        %733 = vmatprep.subr.mxu0 0.0
        %734 = vmatpush1.msra.mxu0 %v426
        %735 = vmatprep.subr.mxu0 0.0
        %736 = vmatpush1.msra.mxu0 %v427
        %737 = vmatprep.subr.mxu0 0.0
        %738 = vmatpush1.msra.mxu0 %v428
        %739 = vmatprep.subr.mxu0 0.0
        %740 = vmatpush1.msra.mxu0 %v429
        %741 = vmatprep.subr.mxu0 0.0
        %742 = vmatpush1.msra.mxu0 %v430
        %743 = vmatprep.subr.mxu0 0.0
        %744 = vmatpush1.msra.mxu0 %v431
        %745 = vmatprep.subr.mxu0 0.0
        %746 = vmatpush1.msra.mxu0 %v432
        %747 = vmatprep.subr.mxu0 0.0
        %748 = vmatpush1.msra.mxu0 %v433
        %749 = vmatprep.subr.mxu0 0.0
        %750 = vmatpush1.msra.mxu0 %v434
        %751 = vmatprep.subr.mxu0 0.0
        %752 = vmatpush1.msra.mxu0 %v435
        %753 = vmatprep.subr.mxu0 0.0
        %754 = vmatpush1.msra.mxu0 %v436
        %755 = vmatprep.subr.mxu0 0.0
        %756 = vmatpush1.msra.mxu0 %v437
        %757 = vmatprep.subr.mxu0 0.0
        %758 = vmatpush1.msra.mxu0 %v438
        %759 = vmatprep.subr.mxu0 0.0
        %760 = vmatpush1.msra.mxu0 %v439
        %761 = vmatprep.subr.mxu0 0.0
        %762 = vmatpush1.msra.mxu0 %v440
        %763 = vmatprep.subr.mxu0 0.0
        %764 = vmatpush1.msra.mxu0 %v441
        %765 = vmatprep.subr.mxu0 0.0
        %766 = vmatpush1.msra.mxu0 %v442
        %767 = vmatprep.subr.mxu0 0.0
        %768 = vmatpush1.msra.mxu0 %v443
        %769 = vmatprep.subr.mxu0 0.0
        %770 = vmatpush1.msra.mxu0 %v444
        %771 = vmatprep.subr.mxu0 0.0
        %772 = vmatpush1.msra.mxu0 %v445
        %773 = vmatprep.subr.mxu0 0.0
        %774 = vmatpush1.msra.mxu0 %v446
        %775 = vmatprep.subr.mxu0 0.0
        %776 = vmatpush1.msra.mxu0 %v447
        %777 = vmatprep.subr.mxu0 0.0
        %778 = vmatpush1.msra.mxu0 %v448
        %779 = vmatprep.subr.mxu0 0.0
        %780 = vmatpush1.msra.mxu0 %v449
        %781 = vmatprep.subr.mxu0 0.0
        %782 = vmatpush1.msra.mxu0 %v450
        %783 = vmatprep.subr.mxu0 0.0
        %784 = vmatpush1.msra.mxu0 %v451
        %785 = vmatprep.subr.mxu0 0.0
        %786 = vmatpush1.msra.mxu0 %v452
        %787 = vmatprep.subr.mxu0 0.0
        %788 = vmatpush1.msra.mxu0 %v453
        %789 = vmatprep.mubr.f32.mxu0 %v653
        %790 = vmatmul.mubr.f32.gmra.mrb[0].mxu0 %v652
        %v791 = vpop.f32.mrb[0].mxu0
        %v792 = vadd.f32 %v722, %v791
        %v793 = vpop.f32.mrb[0].mxu0
        %794 = vdwg.mxu0
        %v795 = vadd.f32 %v654, %v792
        %796 = vst [vmem:[#allocation2] sm:$0xff] %v795
        // Predicated region
        $region65: #{tpu_custom_call.1} parent=39 // pred_check
          %p797 = pneg %p306
        $region66: #{tpu_custom_call.1} parent=39 // pred_check_branch
          %799 = sbr.rel (%p797) target = $region68
        $region67: #{tpu_custom_call.1} parent=39 // pred_region
          %v800 = vld [vmem:[#allocation2] sm:$0xff]
          %801 = vst [vmem:[%s305] sm:$0xff] %v800
        $region68: #{tpu_custom_call.1} parent=39 // pred_fallthru
          _
        %s802 = sand.u32 %s154, 1
        %s803 = scalar_lea.sflag [#allocation5], %s802
        %s804 = sand.u32 %s154, 1
        %s805 = smul.addr %s804, 8
        %s806 = scalar_lea.vmem [#allocation12], %s805
        // Predicated region
        $region69: #{tpu_custom_call.1} parent=39 // pred_check
          %p807 = pneg %p164
        $region70: #{tpu_custom_call.1} parent=39 // pred_check_branch
          %809 = sbr.rel (%p807) target = $region72
        $region71: #{tpu_custom_call.1} parent=39 // pred_region
          %s811 = ssub.s32 128, 128
          %812 = vsyncadd %s803, %s811
          %s813 = smul.addr %s28, 128
          %s814 = scalar_lea.hbm %s5, %s813
          %s816 = sshll.u32 %s806, 4
          %s817 = int_to_ptr.vmem [resolvable:$true] %s816
          %819 = dma.vmem_to_hbm [thread:$0]  %s817, 128, %s814, %s803
        $region72: #{tpu_custom_call.1} parent=39 // pred_fallthru
          _
      $region40: #{tpu_custom_call.1} parent=5 // pred_fallthru
        _
      %p820 = scmp.le.s32.totalorder 2, %s19
      // Predicated region
      $region73: #{tpu_custom_call.1} parent=5 // pred_check
        %p821 = pneg %p820
      $region74: #{tpu_custom_call.1} parent=5 // pred_check_branch
        %823 = sbr.rel (%p821) target = $region76
      $region75: #{tpu_custom_call.1} parent=5 // pred_region
        %s824 = ssub.s32 %s19, 2
        // Predicated region
        $region77: #{tpu_custom_call.1} parent=75 // pred_check
          %p825 = pneg %p170
        $region78: #{tpu_custom_call.1} parent=75 // pred_check_branch
          %827 = sbr.rel (%p825) target = $region80
        $region79: #{tpu_custom_call.1} parent=75 // pred_region
          %s828 = sand.u32 %s155, 1
          %s829 = scalar_lea.sflag [#allocation5], %s828
          %s830 = sand.u32 %s155, 1
          %s831 = smul.addr %s830, 8
          %s832 = scalar_lea.vmem [#allocation12], %s831
          %833 = dma.done %s829, 128
        $region80: #{tpu_custom_call.1} parent=75 // pred_fallthru
          _
      $region76: #{tpu_custom_call.1} parent=5 // pred_fallthru
        _
    $region6: #{tpu_custom_call.1} parent=1 // loop_footer
      %s23 = sadd.s32 1, %s19
    $region7: #{tpu_custom_call.1} parent=1 // loop_footer_branch
      %18 = sbr.rel target = $region3
    $region8: #{tpu_custom_call.1} parent=1 // loop_exit
      _
    %834 = vsyncpa [#allocation4], 1
    %s835 = scalar_lea.sflag [#allocation4], 1
    %836 = vsyncpa %s835, 1
    %837 = vsyncpa [#allocation7], 1
    %838 = vsyncpa [#allocation10], 1
    %839 = vsyncpa [#allocation5], 1
    %s840 = scalar_lea.sflag [#allocation5], 1
    %841 = vsyncpa %s840, 1

</llo_original>
